<compile_context>
chip_gen: v6e
topology: v6e:2x2x1
jax: 0.10.0
libtpu: 0.0.40
codegen_flags: <defaults>
</compile_context>

<pallas_src>
import functools

import numpy as np
import jax
import jax.numpy as jnp
from jax.experimental import pallas as pl
from jax.experimental.pallas import tpu as pltpu

RX, RY, RZ = 0, 1, 2   # rotation-basis codes (replaces np.random.choice([qml.RX, qml.RY, qml.RZ]))
_ROWS = 8              # sublane replication of the state row vector


def _make_kernel(num_layers):
    def kernel(s_re_ref, s_im_ref, u_re_ref, u_im_ref, m_ref, b_ref, out_ref):
        f32 = jnp.float32
        sre = s_re_ref[...]                      # (8, D) initial state (real)
        sim = s_im_ref[...]                      # (8, D) initial state (imag)
        for l in range(num_layers):              # static unroll; num_layers is tiny
            ure = u_re_ref[l]                    # (D, D) fused layer unitary, real part
            uim = u_im_ref[l]                    # (D, D) fused layer unitary, imag part
            nre = (jnp.dot(sre, ure, preferred_element_type=f32)
                   - jnp.dot(sim, uim, preferred_element_type=f32))
            nim = (jnp.dot(sre, uim, preferred_element_type=f32)
                   + jnp.dot(sim, ure, preferred_element_type=f32))
            sre, sim = nre, nim
        prob = sre * sre + sim * sim             # |amplitude|^2, (8, D)
        # fused <Z_i> reduction + upscaling Linear: out = prob @ (zsign @ W^T) + b
        out_ref[...] = (jnp.dot(prob, m_ref[...], preferred_element_type=f32)
                        + b_ref[...])
    return kernel


def _rot2(code, theta):
    """2x2 single-qubit rotation matrix (complex64), PennyLane convention."""
    c = jnp.cos(theta * 0.5).astype(jnp.complex64)
    s = jnp.sin(theta * 0.5).astype(jnp.complex64)
    zero = jnp.zeros((), jnp.complex64)
    if code == RX:   # [[c, -is], [-is, c]]
        return jnp.stack([jnp.stack([c, -1j * s]), jnp.stack([-1j * s, c])])
    if code == RY:   # [[c, -s], [s, c]]
        return jnp.stack([jnp.stack([c, -s]), jnp.stack([s, c])])
    # RZ: diag(c - is, c + is)
    return jnp.stack([jnp.stack([c - 1j * s, zero]), jnp.stack([zero, c + 1j * s])])


@functools.partial(jax.jit, static_argnames=("basis_codes",))
def quantum_generator_forward(latent, q_weights, lin_w, lin_b, basis_codes):
    """latent: (n,), q_weights: (num_layers, n), lin_w: (data_dim, n), lin_b: (data_dim,).
    basis_codes: tuple of tuples of {RX,RY,RZ} codes (static)."""
    q_weights = jnp.asarray(q_weights, jnp.float32)
    latent = jnp.asarray(latent, jnp.float32)
    num_layers, n = q_weights.shape
    D = 1 << n
    data_dimension = lin_w.shape[0]
    n_pad = ((data_dimension + 127) // 128) * 128   # lane-dense output width

    # ---- host structural constants (numpy) ----
    # CNOT chain 0->1->...->n-1 as a left-multiply basis permutation matrix.
    p_left = np.zeros((D, D), np.float32)
    for k in range(D):
        bits = [(k >> (n - 1 - i)) & 1 for i in range(n)]
        for i in range(n - 1):
            if bits[i] == 1:
                bits[i + 1] ^= 1
        fk = sum(b << (n - 1 - i) for i, b in enumerate(bits))
        p_left[fk, k] = 1.0
    # PauliZ sign table: zsign[k, i] = (-1)**bit_i(k), wire 0 = MSB.
    zsign = np.zeros((D, n), np.float32)
    for k in range(D):
        for i in range(n):
            zsign[k, i] = 1.0 - 2.0 * ((k >> (n - 1 - i)) & 1)

    # ---- JAX glue: initial state = state_preparation applied to |0...0> ----
    # RX(theta)|0> = [cos(theta/2), -i sin(theta/2)]  -> product state via Kronecker.
    c = jnp.cos(latent * 0.5).astype(jnp.complex64)
    s = jnp.sin(latent * 0.5).astype(jnp.complex64)
    state = jnp.ones((1,), jnp.complex64)
    for i in range(n):                       # wire 0 first => wire 0 is the MSB
        state = jnp.kron(state, jnp.stack([c[i], -1j * s[i]]))
    s_re = jnp.broadcast_to(jnp.real(state).astype(jnp.float32), (_ROWS, D))
    s_im = jnp.broadcast_to(jnp.imag(state).astype(jnp.float32), (_ROWS, D))

    # ---- JAX glue: one fused right-multiply unitary per variational layer ----
    p_left_c = jnp.asarray(p_left, jnp.complex64)
    u_re_layers, u_im_layers = [], []
    for l in range(num_layers):
        R = jnp.ones((1, 1), jnp.complex64)
        for i in range(n):
            R = jnp.kron(R, _rot2(basis_codes[l][i], q_weights[l, i]))
        M = (p_left_c @ R).T                 # row_new = row_old @ M  (plain transpose)
        u_re_layers.append(jnp.real(M).astype(jnp.float32))
        u_im_layers.append(jnp.imag(M).astype(jnp.float32))
    u_re = jnp.stack(u_re_layers)            # (num_layers, D, D)
    u_im = jnp.stack(u_im_layers)

    # ---- fold PauliZ reduction into the upscaling Linear ----
    m_out = jnp.asarray(zsign) @ jnp.asarray(lin_w, jnp.float32).T       # (D, data_dim)
    m_out = jnp.pad(m_out, ((0, 0), (0, n_pad - data_dimension)))
    b_pad = jnp.pad(jnp.asarray(lin_b, jnp.float32),
                    (0, n_pad - data_dimension)).reshape(1, n_pad)

    vmem = lambda: pl.BlockSpec(memory_space=pltpu.MemorySpace.VMEM)
    out = pl.pallas_call(
        _make_kernel(num_layers),
        out_shape=jax.ShapeDtypeStruct((_ROWS, n_pad), jnp.float32),
        in_specs=[vmem()] * 6,
        out_specs=vmem(),
    )(s_re, s_im, u_re, u_im, m_out, b_pad)
    return out[0, :data_dimension]


# ---------------- pure numpy reference (statevector simulation) ----------------
def reference_forward(latent, q_weights, lin_w, lin_b, basis_codes):
    latent = np.asarray(latent, np.float64)
    W = np.asarray(q_weights, np.float64)
    n = latent.shape[0]
    num_layers = W.shape[0]
    state = np.zeros((2,) * n, np.complex128)
    state[(0,) * n] = 1.0

    def rot_mat(code, th):
        c, s = np.cos(th / 2), np.sin(th / 2)
        if code == RX:
            return np.array([[c, -1j * s], [-1j * s, c]])
        if code == RY:
            return np.array([[c, -s], [s, c]], dtype=np.complex128)
        return np.array([[c - 1j * s, 0], [0, c + 1j * s]])

    def apply_1q(st, U, q):
        st = np.tensordot(U, st, axes=([1], [q]))
        return np.moveaxis(st, 0, q)

    cnot = np.zeros((2, 2, 2, 2), np.complex128)
    for i0 in range(2):
        for i1 in range(2):
            cnot[i0, i1 ^ i0, i0, i1] = 1.0

    def apply_cnot(st, q0, q1):
        st = np.tensordot(cnot, st, axes=([2, 3], [q0, q1]))
        return np.moveaxis(st, [0, 1], [q0, q1])

    for i in range(n):
        state = apply_1q(state, rot_mat(RX, latent[i]), i)
    for l in range(num_layers):
        for i in range(n):
            state = apply_1q(state, rot_mat(basis_codes[l][i], W[l, i]), i)
        for i in range(n - 1):
            state = apply_cnot(state, i, i + 1)

    probs = np.abs(state) ** 2
    expvals = np.zeros(n)
    for i in range(n):
        sign = (1.0 - 2.0 * np.arange(2)).reshape([1] * i + [2] + [1] * (n - 1 - i))
        expvals[i] = (probs * sign).sum()
    return expvals @ np.asarray(lin_w, np.float64).T + np.asarray(lin_b, np.float64)


if __name__ == "__main__":
    latent_dim, num_layers, data_dimension = 4, 3, 32

    # deterministic "generate_rotation_bases" (static -> hashable tuple of tuples)
    rng = np.random.default_rng(0)
    basis_codes = tuple(tuple(int(rng.integers(0, 3)) for _ in range(latent_dim))
                        for _ in range(num_layers))

    key = jax.random.PRNGKey(0)
    k1, k2, k3, k4 = jax.random.split(key, 4)
    # nn.Parameter W ~ U(-pi, pi)
    q_weights = jax.random.uniform(k1, (num_layers, latent_dim), jnp.float32,
                                   minval=-np.pi, maxval=np.pi)
    # latent_variables ~ U(-pi, pi) (sampled in the wrapper instead of inside forward)
    latent = jax.random.uniform(k2, (latent_dim,), jnp.float32,
                                minval=-np.pi, maxval=np.pi)
    # nn.Linear(latent_dim, data_dimension) with xavier_uniform_ weight, default bias init
    w_bound = float(np.sqrt(6.0 / (latent_dim + data_dimension)))
    lin_w = jax.random.uniform(k3, (data_dimension, latent_dim), jnp.float32,
                               minval=-w_bound, maxval=w_bound)
    b_bound = 1.0 / float(np.sqrt(latent_dim))
    lin_b = jax.random.uniform(k4, (data_dimension,), jnp.float32,
                               minval=-b_bound, maxval=b_bound)

    out = quantum_generator_forward(latent, q_weights, lin_w, lin_b, basis_codes)
    out = jax.block_until_ready(out)

    ref = reference_forward(np.asarray(latent), np.asarray(q_weights),
                            np.asarray(lin_w), np.asarray(lin_b), basis_codes)
    assert out.shape == (data_dimension,), out.shape
    assert np.allclose(np.asarray(out), ref, rtol=1e-4, atol=1e-4), (np.asarray(out), ref)
    print("KERNEL_OK")
</pallas_src>

<mosaic_0001>
module attributes {stable_mosaic.version = 11 : i64} {
  func.func @kernel(%arg0: memref<8x16xf32, #tpu.memory_space<vmem>>, %arg1: memref<8x16xf32, #tpu.memory_space<vmem>>, %arg2: memref<3x16x16xf32, #tpu.memory_space<vmem>>, %arg3: memref<3x16x16xf32, #tpu.memory_space<vmem>>, %arg4: memref<16x128xf32, #tpu.memory_space<vmem>>, %arg5: memref<1x128xf32, #tpu.memory_space<vmem>>, %arg6: memref<8x128xf32, #tpu.memory_space<vmem>>) attributes {dimension_semantics = [], scalar_prefetch = 0 : i64, scratch_operands = 0 : i64, tpu.core_type = #tpu.core_type<tc>} {
    %c0 = arith.constant 0 : index
    %c0_0 = arith.constant 0 : index
    %0 = vector.load %arg0[%c0, %c0_0] : memref<8x16xf32, #tpu.memory_space<vmem>>, vector<8x16xf32>
    %c0_1 = arith.constant 0 : index
    %c0_2 = arith.constant 0 : index
    %1 = vector.load %arg1[%c0_1, %c0_2] : memref<8x16xf32, #tpu.memory_space<vmem>>, vector<8x16xf32>
    %c0_3 = arith.constant 0 : index
    %c0_4 = arith.constant 0 : index
    %c0_5 = arith.constant 0 : index
    %2 = vector.load %arg2[%c0_3, %c0_4, %c0_5] : memref<3x16x16xf32, #tpu.memory_space<vmem>>, vector<1x16x16xf32>
    %3 = vector.shape_cast %2 : vector<1x16x16xf32> to vector<16x16xf32>
    %c0_6 = arith.constant 0 : index
    %c0_7 = arith.constant 0 : index
    %c0_8 = arith.constant 0 : index
    %4 = vector.load %arg3[%c0_6, %c0_7, %c0_8] : memref<3x16x16xf32, #tpu.memory_space<vmem>>, vector<1x16x16xf32>
    %5 = vector.shape_cast %4 : vector<1x16x16xf32> to vector<16x16xf32>
    %cst = arith.constant dense<0.000000e+00> : vector<8x16xf32>
    %6 = tpu.matmul %0, %3, %cst {dimension_numbers = #tpu.dot_dimension_numbers<[1], [0], [0], [1], [0, 0, 1, 1], [], []>} : vector<8x16xf32>, vector<16x16xf32>, vector<8x16xf32> -> vector<8x16xf32>
    %cst_9 = arith.constant dense<0.000000e+00> : vector<8x16xf32>
    %7 = tpu.matmul %1, %5, %cst_9 {dimension_numbers = #tpu.dot_dimension_numbers<[1], [0], [0], [1], [0, 0, 1, 1], [], []>} : vector<8x16xf32>, vector<16x16xf32>, vector<8x16xf32> -> vector<8x16xf32>
    %8 = arith.subf %6, %7 : vector<8x16xf32>
    %cst_10 = arith.constant dense<0.000000e+00> : vector<8x16xf32>
    %9 = tpu.matmul %0, %5, %cst_10 {dimension_numbers = #tpu.dot_dimension_numbers<[1], [0], [0], [1], [0, 0, 1, 1], [], []>} : vector<8x16xf32>, vector<16x16xf32>, vector<8x16xf32> -> vector<8x16xf32>
    %cst_11 = arith.constant dense<0.000000e+00> : vector<8x16xf32>
    %10 = tpu.matmul %1, %3, %cst_11 {dimension_numbers = #tpu.dot_dimension_numbers<[1], [0], [0], [1], [0, 0, 1, 1], [], []>} : vector<8x16xf32>, vector<16x16xf32>, vector<8x16xf32> -> vector<8x16xf32>
    %11 = arith.addf %9, %10 : vector<8x16xf32>
    %c1 = arith.constant 1 : index
    %c0_12 = arith.constant 0 : index
    %c0_13 = arith.constant 0 : index
    %12 = vector.load %arg2[%c1, %c0_12, %c0_13] : memref<3x16x16xf32, #tpu.memory_space<vmem>>, vector<1x16x16xf32>
    %13 = vector.shape_cast %12 : vector<1x16x16xf32> to vector<16x16xf32>
    %c1_14 = arith.constant 1 : index
    %c0_15 = arith.constant 0 : index
    %c0_16 = arith.constant 0 : index
    %14 = vector.load %arg3[%c1_14, %c0_15, %c0_16] : memref<3x16x16xf32, #tpu.memory_space<vmem>>, vector<1x16x16xf32>
    %15 = vector.shape_cast %14 : vector<1x16x16xf32> to vector<16x16xf32>
    %cst_17 = arith.constant dense<0.000000e+00> : vector<8x16xf32>
    %16 = tpu.matmul %8, %13, %cst_17 {dimension_numbers = #tpu.dot_dimension_numbers<[1], [0], [0], [1], [0, 0, 1, 1], [], []>} : vector<8x16xf32>, vector<16x16xf32>, vector<8x16xf32> -> vector<8x16xf32>
    %cst_18 = arith.constant dense<0.000000e+00> : vector<8x16xf32>
    %17 = tpu.matmul %11, %15, %cst_18 {dimension_numbers = #tpu.dot_dimension_numbers<[1], [0], [0], [1], [0, 0, 1, 1], [], []>} : vector<8x16xf32>, vector<16x16xf32>, vector<8x16xf32> -> vector<8x16xf32>
    %18 = arith.subf %16, %17 : vector<8x16xf32>
    %cst_19 = arith.constant dense<0.000000e+00> : vector<8x16xf32>
    %19 = tpu.matmul %8, %15, %cst_19 {dimension_numbers = #tpu.dot_dimension_numbers<[1], [0], [0], [1], [0, 0, 1, 1], [], []>} : vector<8x16xf32>, vector<16x16xf32>, vector<8x16xf32> -> vector<8x16xf32>
    %cst_20 = arith.constant dense<0.000000e+00> : vector<8x16xf32>
    %20 = tpu.matmul %11, %13, %cst_20 {dimension_numbers = #tpu.dot_dimension_numbers<[1], [0], [0], [1], [0, 0, 1, 1], [], []>} : vector<8x16xf32>, vector<16x16xf32>, vector<8x16xf32> -> vector<8x16xf32>
    %21 = arith.addf %19, %20 : vector<8x16xf32>
    %c2 = arith.constant 2 : index
    %c0_21 = arith.constant 0 : index
    %c0_22 = arith.constant 0 : index
    %22 = vector.load %arg2[%c2, %c0_21, %c0_22] : memref<3x16x16xf32, #tpu.memory_space<vmem>>, vector<1x16x16xf32>
    %23 = vector.shape_cast %22 : vector<1x16x16xf32> to vector<16x16xf32>
    %c2_23 = arith.constant 2 : index
    %c0_24 = arith.constant 0 : index
    %c0_25 = arith.constant 0 : index
    %24 = vector.load %arg3[%c2_23, %c0_24, %c0_25] : memref<3x16x16xf32, #tpu.memory_space<vmem>>, vector<1x16x16xf32>
    %25 = vector.shape_cast %24 : vector<1x16x16xf32> to vector<16x16xf32>
    %cst_26 = arith.constant dense<0.000000e+00> : vector<8x16xf32>
    %26 = tpu.matmul %18, %23, %cst_26 {dimension_numbers = #tpu.dot_dimension_numbers<[1], [0], [0], [1], [0, 0, 1, 1], [], []>} : vector<8x16xf32>, vector<16x16xf32>, vector<8x16xf32> -> vector<8x16xf32>
    %cst_27 = arith.constant dense<0.000000e+00> : vector<8x16xf32>
    %27 = tpu.matmul %21, %25, %cst_27 {dimension_numbers = #tpu.dot_dimension_numbers<[1], [0], [0], [1], [0, 0, 1, 1], [], []>} : vector<8x16xf32>, vector<16x16xf32>, vector<8x16xf32> -> vector<8x16xf32>
    %28 = arith.subf %26, %27 : vector<8x16xf32>
    %cst_28 = arith.constant dense<0.000000e+00> : vector<8x16xf32>
    %29 = tpu.matmul %18, %25, %cst_28 {dimension_numbers = #tpu.dot_dimension_numbers<[1], [0], [0], [1], [0, 0, 1, 1], [], []>} : vector<8x16xf32>, vector<16x16xf32>, vector<8x16xf32> -> vector<8x16xf32>
    %cst_29 = arith.constant dense<0.000000e+00> : vector<8x16xf32>
    %30 = tpu.matmul %21, %23, %cst_29 {dimension_numbers = #tpu.dot_dimension_numbers<[1], [0], [0], [1], [0, 0, 1, 1], [], []>} : vector<8x16xf32>, vector<16x16xf32>, vector<8x16xf32> -> vector<8x16xf32>
    %31 = arith.addf %29, %30 : vector<8x16xf32>
    %32 = arith.mulf %28, %28 : vector<8x16xf32>
    %33 = arith.mulf %31, %31 : vector<8x16xf32>
    %34 = arith.addf %32, %33 : vector<8x16xf32>
    %c0_30 = arith.constant 0 : index
    %c0_31 = arith.constant 0 : index
    %35 = vector.load %arg4[%c0_30, %c0_31] : memref<16x128xf32, #tpu.memory_space<vmem>>, vector<16x128xf32>
    %cst_32 = arith.constant dense<0.000000e+00> : vector<8x128xf32>
    %36 = tpu.matmul %34, %35, %cst_32 {dimension_numbers = #tpu.dot_dimension_numbers<[1], [0], [0], [1], [0, 0, 1, 1], [], []>} : vector<8x16xf32>, vector<16x128xf32>, vector<8x128xf32> -> vector<8x128xf32>
    %c0_33 = arith.constant 0 : index
    %c0_34 = arith.constant 0 : index
    %37 = vector.load %arg5[%c0_33, %c0_34] : memref<1x128xf32, #tpu.memory_space<vmem>>, vector<1x128xf32>
    %38 = vector.broadcast %37 : vector<1x128xf32> to vector<8x128xf32>
    %39 = arith.addf %36, %38 : vector<8x128xf32>
    %c0_35 = arith.constant 0 : index
    %c0_36 = arith.constant 0 : index
    %40 = vector.load %arg6[%c0_35, %c0_36] : memref<8x128xf32, #tpu.memory_space<vmem>>, vector<8x128xf32>
    tpu.vector_store %arg6[%c0_35, %c0_36], %39 {strides = array<i32>} : memref<8x128xf32, #tpu.memory_space<vmem>>, vector<8x128xf32>,
    return
  }
}

</mosaic_0001>

<llo_original>
// kernel: quantum_generator_forward.1
$region0: #{quantum_generator_forward.1}
  #allocation0 [shape = 'u32[]', space=smem, size = 0x4, offset = 0x4, fixed_abs, tag = 'smem constant byte address 0x4 - core index']
  #allocation1 [shape = 'u32[144,128]{1,0:T(1,128)}', space=vmem, size = 0x12000, scoped, tag = 'internal scratch']
  %s0 = inlined_call_operand.vmem [shape: f32[8,16], index: 0, kind: input, shape index: {}]
  %s1 = inlined_call_operand.vmem [shape: f32[8,16], index: 1, kind: input, shape index: {}]
  %s2 = inlined_call_operand.vmem [shape: f32[3,16,16], index: 2, kind: input, shape index: {}]
  %s3 = inlined_call_operand.vmem [shape: f32[3,16,16], index: 3, kind: input, shape index: {}]
  %s4 = inlined_call_operand.vmem [shape: f32[16,128], index: 4, kind: input, shape index: {}]
  %s5 = inlined_call_operand.vmem [shape: f32[1,128], index: 5, kind: input, shape index: {}]
  %s6 = inlined_call_operand.vmem [shape: f32[8,128], index: 6, kind: output, shape index: {}]
  %s7 = sld [smem:[#allocation0]]
  $region34: #{quantum_generator_forward.1} parent=0
    _
  %s9 = ssub.s32 1, %s7
  %s10 = scalar_select 0, %s9, %s7
  // Predicated region
  $region2: #{quantum_generator_forward.1} parent=0 // pred_check
    _
  $region3: #{quantum_generator_forward.1} parent=0 // pred_check_branch
    %12 = sbr.rel (0) target = $region5
  $region4: #{quantum_generator_forward.1} parent=0 // pred_region
    _
  $region5: #{quantum_generator_forward.1} parent=0 // pred_fallthru
    _
  // Predicated region
  $region6: #{quantum_generator_forward.1} parent=0 // pred_check
    _
  $region7: #{quantum_generator_forward.1} parent=0 // pred_check_branch
    %14 = sbr.rel (0) target = $region9
  $region8: #{quantum_generator_forward.1} parent=0 // pred_region
    _
  $region9: #{quantum_generator_forward.1} parent=0 // pred_fallthru
    _
  // Predicated region
  $region10: #{quantum_generator_forward.1} parent=0 // pred_check
    _
  $region11: #{quantum_generator_forward.1} parent=0 // pred_check_branch
    %16 = sbr.rel (0) target = $region13
  $region12: #{quantum_generator_forward.1} parent=0 // pred_region
    _
  $region13: #{quantum_generator_forward.1} parent=0 // pred_fallthru
    _
  // Predicated region
  $region14: #{quantum_generator_forward.1} parent=0 // pred_check
    _
  $region15: #{quantum_generator_forward.1} parent=0 // pred_check_branch
    %18 = sbr.rel (0) target = $region17
  $region16: #{quantum_generator_forward.1} parent=0 // pred_region
    _
  $region17: #{quantum_generator_forward.1} parent=0 // pred_fallthru
    _
  // Predicated region
  $region18: #{quantum_generator_forward.1} parent=0 // pred_check
    _
  $region19: #{quantum_generator_forward.1} parent=0 // pred_check_branch
    %20 = sbr.rel (0) target = $region21
  $region20: #{quantum_generator_forward.1} parent=0 // pred_region
    _
  $region21: #{quantum_generator_forward.1} parent=0 // pred_fallthru
    _
  // Predicated region
  $region22: #{quantum_generator_forward.1} parent=0 // pred_check
    _
  $region23: #{quantum_generator_forward.1} parent=0 // pred_check_branch
    %22 = sbr.rel (0) target = $region25
  $region24: #{quantum_generator_forward.1} parent=0 // pred_region
    _
  $region25: #{quantum_generator_forward.1} parent=0 // pred_fallthru
    _
  %v23 = vld [vmem:[%s0] sm:$0xff]
  %v24 = vld [vmem:[%s1] sm:$0xff]
  %v25 = vld [vmem:[%s2] sm:$0xff]
  %v26 = vld [vmem:[%s2 + $0x8] sm:$0xff]
  %v27 = vld [vmem:[%s3] sm:$0xff]
  %v28 = vld [vmem:[%s3 + $0x8] sm:$0xff]
  %vm29 = vcmask 130048
  %v31 = vsel %vm29, %v23, 0
  %33 = vmatprep.subr.mxu0 0.0
  %34 = vmatpush1.msra.mxu0 0.0
  %35 = vmatprep.subr.mxu0 0.0
  %36 = vmatpush1.msra.mxu0 0.0
  %37 = vmatprep.subr.mxu0 0.0
  %38 = vmatpush1.msra.mxu0 0.0
  %39 = vmatprep.subr.mxu0 0.0
  %40 = vmatpush1.msra.mxu0 0.0
  %41 = vmatprep.subr.mxu0 0.0
  %42 = vmatpush1.msra.mxu0 0.0
  %43 = vmatprep.subr.mxu0 0.0
  %44 = vmatpush1.msra.mxu0 0.0
  %45 = vmatprep.subr.mxu0 0.0
  %46 = vmatpush1.msra.mxu0 0.0
  %47 = vmatprep.subr.mxu0 0.0
  %48 = vmatpush1.msra.mxu0 0.0
  %49 = vmatprep.subr.mxu0 0.0
  %50 = vmatpush1.msra.mxu0 0.0
  %51 = vmatprep.subr.mxu0 0.0
  %52 = vmatpush1.msra.mxu0 0.0
  %53 = vmatprep.subr.mxu0 0.0
  %54 = vmatpush1.msra.mxu0 0.0
  %55 = vmatprep.subr.mxu0 0.0
  %56 = vmatpush1.msra.mxu0 0.0
  %57 = vmatprep.subr.mxu0 0.0
  %58 = vmatpush1.msra.mxu0 0.0
  %59 = vmatprep.subr.mxu0 0.0
  %60 = vmatpush1.msra.mxu0 0.0
  %61 = vmatprep.subr.mxu0 0.0
  %62 = vmatpush1.msra.mxu0 %v26
  %63 = vmatprep.subr.mxu0 0.0
  %64 = vmatpush1.msra.mxu0 %v25
  %65 = vmatprep.subr.mxu0 0.0
  %66 = vmatpush2.msra.mxu0 0.0
  %67 = vmatprep.subr.mxu0 0.0
  %68 = vmatpush2.msra.mxu0 0.0
  %69 = vmatprep.subr.mxu0 0.0
  %70 = vmatpush2.msra.mxu0 0.0
  %71 = vmatprep.subr.mxu0 0.0
  %72 = vmatpush2.msra.mxu0 0.0
  %73 = vmatprep.subr.mxu0 0.0
  %74 = vmatpush2.msra.mxu0 0.0
  %75 = vmatprep.subr.mxu0 0.0
  %76 = vmatpush2.msra.mxu0 0.0
  %77 = vmatprep.subr.mxu0 0.0
  %78 = vmatpush2.msra.mxu0 0.0
  %79 = vmatprep.subr.mxu0 0.0
  %80 = vmatpush2.msra.mxu0 0.0
  %81 = vmatprep.subr.mxu0 0.0
  %82 = vmatpush2.msra.mxu0 0.0
  %83 = vmatprep.subr.mxu0 0.0
  %84 = vmatpush2.msra.mxu0 0.0
  %85 = vmatprep.subr.mxu0 0.0
  %86 = vmatpush2.msra.mxu0 0.0
  %87 = vmatprep.subr.mxu0 0.0
  %88 = vmatpush2.msra.mxu0 0.0
  %89 = vmatprep.subr.mxu0 0.0
  %90 = vmatpush2.msra.mxu0 0.0
  %91 = vmatprep.subr.mxu0 0.0
  %92 = vmatpush2.msra.mxu0 0.0
  %93 = vmatprep.subr.mxu0 0.0
  %94 = vmatpush2.msra.mxu0 0.0
  %95 = vmatprep.subr.mxu0 0.0
  %96 = vmatpush2.msra.mxu0 0.0
  %97 = vmatprep.mubr.f32.mxu0 0.0
  %98 = vmatmul.mubr.f32.gmra.mxu0 %v31
  %v99 = vpop.f32.mrf.mxu0
  %v100 = vadd.f32 0.0, %v99
  %v101 = vpop.f32.mrf.mxu0
  %102 = vdwg.mxu0
  %v104 = vsel %vm29, %v24, 0
  %106 = vmatprep.subr.mxu0 0.0
  %107 = vmatpush1.msra.mxu0 0.0
  %108 = vmatprep.subr.mxu0 0.0
  %109 = vmatpush1.msra.mxu0 0.0
  %110 = vmatprep.subr.mxu0 0.0
  %111 = vmatpush1.msra.mxu0 0.0
  %112 = vmatprep.subr.mxu0 0.0
  %113 = vmatpush1.msra.mxu0 0.0
  %114 = vmatprep.subr.mxu0 0.0
  %115 = vmatpush1.msra.mxu0 0.0
  %116 = vmatprep.subr.mxu0 0.0
  %117 = vmatpush1.msra.mxu0 0.0
  %118 = vmatprep.subr.mxu0 0.0
  %119 = vmatpush1.msra.mxu0 0.0
  %120 = vmatprep.subr.mxu0 0.0
  %121 = vmatpush1.msra.mxu0 0.0
  %122 = vmatprep.subr.mxu0 0.0
  %123 = vmatpush1.msra.mxu0 0.0
  %124 = vmatprep.subr.mxu0 0.0
  %125 = vmatpush1.msra.mxu0 0.0
  %126 = vmatprep.subr.mxu0 0.0
  %127 = vmatpush1.msra.mxu0 0.0
  %128 = vmatprep.subr.mxu0 0.0
  %129 = vmatpush1.msra.mxu0 0.0
  %130 = vmatprep.subr.mxu0 0.0
  %131 = vmatpush1.msra.mxu0 0.0
  %132 = vmatprep.subr.mxu0 0.0
  %133 = vmatpush1.msra.mxu0 0.0
  %134 = vmatprep.subr.mxu0 0.0
  %135 = vmatpush1.msra.mxu0 %v28
  %136 = vmatprep.subr.mxu0 0.0
  %137 = vmatpush1.msra.mxu0 %v27
  %138 = vmatprep.subr.mxu0 0.0
  %139 = vmatpush2.msra.mxu0 0.0
  %140 = vmatprep.subr.mxu0 0.0
  %141 = vmatpush2.msra.mxu0 0.0
  %142 = vmatprep.subr.mxu0 0.0
  %143 = vmatpush2.msra.mxu0 0.0
  %144 = vmatprep.subr.mxu0 0.0
  %145 = vmatpush2.msra.mxu0 0.0
  %146 = vmatprep.subr.mxu0 0.0
  %147 = vmatpush2.msra.mxu0 0.0
  %148 = vmatprep.subr.mxu0 0.0
  %149 = vmatpush2.msra.mxu0 0.0
  %150 = vmatprep.subr.mxu0 0.0
  %151 = vmatpush2.msra.mxu0 0.0
  %152 = vmatprep.subr.mxu0 0.0
  %153 = vmatpush2.msra.mxu0 0.0
  %154 = vmatprep.subr.mxu0 0.0
  %155 = vmatpush2.msra.mxu0 0.0
  %156 = vmatprep.subr.mxu0 0.0
  %157 = vmatpush2.msra.mxu0 0.0
  %158 = vmatprep.subr.mxu0 0.0
  %159 = vmatpush2.msra.mxu0 0.0
  %160 = vmatprep.subr.mxu0 0.0
  %161 = vmatpush2.msra.mxu0 0.0
  %162 = vmatprep.subr.mxu0 0.0
  %163 = vmatpush2.msra.mxu0 0.0
  %164 = vmatprep.subr.mxu0 0.0
  %165 = vmatpush2.msra.mxu0 0.0
  %166 = vmatprep.subr.mxu0 0.0
  %167 = vmatpush2.msra.mxu0 0.0
  %168 = vmatprep.subr.mxu0 0.0
  %169 = vmatpush2.msra.mxu0 0.0
  %170 = vmatprep.mubr.f32.mxu0 0.0
  %171 = vmatmul.mubr.f32.gmra.mxu0 %v104
  %v172 = vpop.f32.mrf.mxu0
  %v173 = vadd.f32 0.0, %v172
  %v174 = vpop.f32.mrf.mxu0
  %175 = vdwg.mxu0
  %v176 = vsub.f32 %v100, %v173
  %177 = vmatprep.subr.mxu0 0.0
  %178 = vmatpush1.msra.mxu0 0.0
  %179 = vmatprep.subr.mxu0 0.0
  %180 = vmatpush1.msra.mxu0 0.0
  %181 = vmatprep.subr.mxu0 0.0
  %182 = vmatpush1.msra.mxu0 0.0
  %183 = vmatprep.subr.mxu0 0.0
  %184 = vmatpush1.msra.mxu0 0.0
  %185 = vmatprep.subr.mxu0 0.0
  %186 = vmatpush1.msra.mxu0 0.0
  %187 = vmatprep.subr.mxu0 0.0
  %188 = vmatpush1.msra.mxu0 0.0
  %189 = vmatprep.subr.mxu0 0.0
  %190 = vmatpush1.msra.mxu0 0.0
  %191 = vmatprep.subr.mxu0 0.0
  %192 = vmatpush1.msra.mxu0 0.0
  %193 = vmatprep.subr.mxu0 0.0
  %194 = vmatpush1.msra.mxu0 0.0
  %195 = vmatprep.subr.mxu0 0.0
  %196 = vmatpush1.msra.mxu0 0.0
  %197 = vmatprep.subr.mxu0 0.0
  %198 = vmatpush1.msra.mxu0 0.0
  %199 = vmatprep.subr.mxu0 0.0
  %200 = vmatpush1.msra.mxu0 0.0
  %201 = vmatprep.subr.mxu0 0.0
  %202 = vmatpush1.msra.mxu0 0.0
  %203 = vmatprep.subr.mxu0 0.0
  %204 = vmatpush1.msra.mxu0 0.0
  %205 = vmatprep.subr.mxu0 0.0
  %206 = vmatpush1.msra.mxu0 %v26
  %207 = vmatprep.subr.mxu0 0.0
  %208 = vmatpush1.msra.mxu0 %v25
  %209 = vmatprep.subr.mxu0 0.0
  %210 = vmatpush2.msra.mxu0 0.0
  %211 = vmatprep.subr.mxu0 0.0
  %212 = vmatpush2.msra.mxu0 0.0
  %213 = vmatprep.subr.mxu0 0.0
  %214 = vmatpush2.msra.mxu0 0.0
  %215 = vmatprep.subr.mxu0 0.0
  %216 = vmatpush2.msra.mxu0 0.0
  %217 = vmatprep.subr.mxu0 0.0
  %218 = vmatpush2.msra.mxu0 0.0
  %219 = vmatprep.subr.mxu0 0.0
  %220 = vmatpush2.msra.mxu0 0.0
  %221 = vmatprep.subr.mxu0 0.0
  %222 = vmatpush2.msra.mxu0 0.0
  %223 = vmatprep.subr.mxu0 0.0
  %224 = vmatpush2.msra.mxu0 0.0
  %225 = vmatprep.subr.mxu0 0.0
  %226 = vmatpush2.msra.mxu0 0.0
  %227 = vmatprep.subr.mxu0 0.0
  %228 = vmatpush2.msra.mxu0 0.0
  %229 = vmatprep.subr.mxu0 0.0
  %230 = vmatpush2.msra.mxu0 0.0
  %231 = vmatprep.subr.mxu0 0.0
  %232 = vmatpush2.msra.mxu0 0.0
  %233 = vmatprep.subr.mxu0 0.0
  %234 = vmatpush2.msra.mxu0 0.0
  %235 = vmatprep.subr.mxu0 0.0
  %236 = vmatpush2.msra.mxu0 0.0
  %237 = vmatprep.subr.mxu0 0.0
  %238 = vmatpush2.msra.mxu0 0.0
  %239 = vmatprep.subr.mxu0 0.0
  %240 = vmatpush2.msra.mxu0 0.0
  %241 = vmatprep.mubr.f32.mxu0 0.0
  %242 = vmatmul.mubr.f32.gmra.mxu0 %v104
  %v243 = vpop.f32.mrf.mxu0
  %v244 = vadd.f32 0.0, %v243
  %v245 = vpop.f32.mrf.mxu0
  %246 = vdwg.mxu0
  %247 = vmatprep.subr.mxu0 0.0
  %248 = vmatpush1.msra.mxu0 0.0
  %249 = vmatprep.subr.mxu0 0.0
  %250 = vmatpush1.msra.mxu0 0.0
  %251 = vmatprep.subr.mxu0 0.0
  %252 = vmatpush1.msra.mxu0 0.0
  %253 = vmatprep.subr.mxu0 0.0
  %254 = vmatpush1.msra.mxu0 0.0
  %255 = vmatprep.subr.mxu0 0.0
  %256 = vmatpush1.msra.mxu0 0.0
  %257 = vmatprep.subr.mxu0 0.0
  %258 = vmatpush1.msra.mxu0 0.0
  %259 = vmatprep.subr.mxu0 0.0
  %260 = vmatpush1.msra.mxu0 0.0
  %261 = vmatprep.subr.mxu0 0.0
  %262 = vmatpush1.msra.mxu0 0.0
  %263 = vmatprep.subr.mxu0 0.0
  %264 = vmatpush1.msra.mxu0 0.0
  %265 = vmatprep.subr.mxu0 0.0
  %266 = vmatpush1.msra.mxu0 0.0
  %267 = vmatprep.subr.mxu0 0.0
  %268 = vmatpush1.msra.mxu0 0.0
  %269 = vmatprep.subr.mxu0 0.0
  %270 = vmatpush1.msra.mxu0 0.0
  %271 = vmatprep.subr.mxu0 0.0
  %272 = vmatpush1.msra.mxu0 0.0
  %273 = vmatprep.subr.mxu0 0.0
  %274 = vmatpush1.msra.mxu0 0.0
  %275 = vmatprep.subr.mxu0 0.0
  %276 = vmatpush1.msra.mxu0 %v28
  %277 = vmatprep.subr.mxu0 0.0
  %278 = vmatpush1.msra.mxu0 %v27
  %279 = vmatprep.subr.mxu0 0.0
  %280 = vmatpush2.msra.mxu0 0.0
  %281 = vmatprep.subr.mxu0 0.0
  %282 = vmatpush2.msra.mxu0 0.0
  %283 = vmatprep.subr.mxu0 0.0
  %284 = vmatpush2.msra.mxu0 0.0
  %285 = vmatprep.subr.mxu0 0.0
  %286 = vmatpush2.msra.mxu0 0.0
  %287 = vmatprep.subr.mxu0 0.0
  %288 = vmatpush2.msra.mxu0 0.0
  %289 = vmatprep.subr.mxu0 0.0
  %290 = vmatpush2.msra.mxu0 0.0
  %291 = vmatprep.subr.mxu0 0.0
  %292 = vmatpush2.msra.mxu0 0.0
  %293 = vmatprep.subr.mxu0 0.0
  %294 = vmatpush2.msra.mxu0 0.0
  %295 = vmatprep.subr.mxu0 0.0
  %296 = vmatpush2.msra.mxu0 0.0
  %297 = vmatprep.subr.mxu0 0.0
  %298 = vmatpush2.msra.mxu0 0.0
  %299 = vmatprep.subr.mxu0 0.0
  %300 = vmatpush2.msra.mxu0 0.0
  %301 = vmatprep.subr.mxu0 0.0
  %302 = vmatpush2.msra.mxu0 0.0
  %303 = vmatprep.subr.mxu0 0.0
  %304 = vmatpush2.msra.mxu0 0.0
  %305 = vmatprep.subr.mxu0 0.0
  %306 = vmatpush2.msra.mxu0 0.0
  %307 = vmatprep.subr.mxu0 0.0
  %308 = vmatpush2.msra.mxu0 0.0
  %309 = vmatprep.subr.mxu0 0.0
  %310 = vmatpush2.msra.mxu0 0.0
  %311 = vmatprep.mubr.f32.mxu0 0.0
  %312 = vmatmul.mubr.f32.gmra.mxu0 %v31
  %v313 = vpop.f32.mrf.mxu0
  %v314 = vadd.f32 %v244, %v313
  %v315 = vpop.f32.mrf.mxu0
  %316 = vdwg.mxu0
  %s317 = scalar_lea.vmem %s2, 16
  %v318 = vld [vmem:[%s317] sm:$0xff]
  %v319 = vld [vmem:[%s317 + $0x8] sm:$0xff]
  %s320 = scalar_lea.vmem %s3, 16
  %v321 = vld [vmem:[%s320] sm:$0xff]
  %v322 = vld [vmem:[%s320 + $0x8] sm:$0xff]
  %v324 = vsel %vm29, %v176, 0
  %326 = vmatprep.subr.mxu0 0.0
  %327 = vmatpush1.msra.mxu0 0.0
  %328 = vmatprep.subr.mxu0 0.0
  %329 = vmatpush1.msra.mxu0 0.0
  %330 = vmatprep.subr.mxu0 0.0
  %331 = vmatpush1.msra.mxu0 0.0
  %332 = vmatprep.subr.mxu0 0.0
  %333 = vmatpush1.msra.mxu0 0.0
  %334 = vmatprep.subr.mxu0 0.0
  %335 = vmatpush1.msra.mxu0 0.0
  %336 = vmatprep.subr.mxu0 0.0
  %337 = vmatpush1.msra.mxu0 0.0
  %338 = vmatprep.subr.mxu0 0.0
  %339 = vmatpush1.msra.mxu0 0.0
  %340 = vmatprep.subr.mxu0 0.0
  %341 = vmatpush1.msra.mxu0 0.0
  %342 = vmatprep.subr.mxu0 0.0
  %343 = vmatpush1.msra.mxu0 0.0
  %344 = vmatprep.subr.mxu0 0.0
  %345 = vmatpush1.msra.mxu0 0.0
  %346 = vmatprep.subr.mxu0 0.0
  %347 = vmatpush1.msra.mxu0 0.0
  %348 = vmatprep.subr.mxu0 0.0
  %349 = vmatpush1.msra.mxu0 0.0
  %350 = vmatprep.subr.mxu0 0.0
  %351 = vmatpush1.msra.mxu0 0.0
  %352 = vmatprep.subr.mxu0 0.0
  %353 = vmatpush1.msra.mxu0 0.0
  %354 = vmatprep.subr.mxu0 0.0
  %355 = vmatpush1.msra.mxu0 %v319
  %356 = vmatprep.subr.mxu0 0.0
  %357 = vmatpush1.msra.mxu0 %v318
  %358 = vmatprep.subr.mxu0 0.0
  %359 = vmatpush2.msra.mxu0 0.0
  %360 = vmatprep.subr.mxu0 0.0
  %361 = vmatpush2.msra.mxu0 0.0
  %362 = vmatprep.subr.mxu0 0.0
  %363 = vmatpush2.msra.mxu0 0.0
  %364 = vmatprep.subr.mxu0 0.0
  %365 = vmatpush2.msra.mxu0 0.0
  %366 = vmatprep.subr.mxu0 0.0
  %367 = vmatpush2.msra.mxu0 0.0
  %368 = vmatprep.subr.mxu0 0.0
  %369 = vmatpush2.msra.mxu0 0.0
  %370 = vmatprep.subr.mxu0 0.0
  %371 = vmatpush2.msra.mxu0 0.0
  %372 = vmatprep.subr.mxu0 0.0
  %373 = vmatpush2.msra.mxu0 0.0
  %374 = vmatprep.subr.mxu0 0.0
  %375 = vmatpush2.msra.mxu0 0.0
  %376 = vmatprep.subr.mxu0 0.0
  %377 = vmatpush2.msra.mxu0 0.0
  %378 = vmatprep.subr.mxu0 0.0
  %379 = vmatpush2.msra.mxu0 0.0
  %380 = vmatprep.subr.mxu0 0.0
  %381 = vmatpush2.msra.mxu0 0.0
  %382 = vmatprep.subr.mxu0 0.0
  %383 = vmatpush2.msra.mxu0 0.0
  %384 = vmatprep.subr.mxu0 0.0
  %385 = vmatpush2.msra.mxu0 0.0
  %386 = vmatprep.subr.mxu0 0.0
  %387 = vmatpush2.msra.mxu0 0.0
  %388 = vmatprep.subr.mxu0 0.0
  %389 = vmatpush2.msra.mxu0 0.0
  %390 = vmatprep.mubr.f32.mxu0 0.0
  %391 = vmatmul.mubr.f32.gmra.mxu0 %v324
  %v392 = vpop.f32.mrf.mxu0
  %v393 = vadd.f32 0.0, %v392
  %v394 = vpop.f32.mrf.mxu0
  %395 = vdwg.mxu0
  %v397 = vsel %vm29, %v314, 0
  %399 = vmatprep.subr.mxu0 0.0
  %400 = vmatpush1.msra.mxu0 0.0
  %401 = vmatprep.subr.mxu0 0.0
  %402 = vmatpush1.msra.mxu0 0.0
  %403 = vmatprep.subr.mxu0 0.0
  %404 = vmatpush1.msra.mxu0 0.0
  %405 = vmatprep.subr.mxu0 0.0
  %406 = vmatpush1.msra.mxu0 0.0
  %407 = vmatprep.subr.mxu0 0.0
  %408 = vmatpush1.msra.mxu0 0.0
  %409 = vmatprep.subr.mxu0 0.0
  %410 = vmatpush1.msra.mxu0 0.0
  %411 = vmatprep.subr.mxu0 0.0
  %412 = vmatpush1.msra.mxu0 0.0
  %413 = vmatprep.subr.mxu0 0.0
  %414 = vmatpush1.msra.mxu0 0.0
  %415 = vmatprep.subr.mxu0 0.0
  %416 = vmatpush1.msra.mxu0 0.0
  %417 = vmatprep.subr.mxu0 0.0
  %418 = vmatpush1.msra.mxu0 0.0
  %419 = vmatprep.subr.mxu0 0.0
  %420 = vmatpush1.msra.mxu0 0.0
  %421 = vmatprep.subr.mxu0 0.0
  %422 = vmatpush1.msra.mxu0 0.0
  %423 = vmatprep.subr.mxu0 0.0
  %424 = vmatpush1.msra.mxu0 0.0
  %425 = vmatprep.subr.mxu0 0.0
  %426 = vmatpush1.msra.mxu0 0.0
  %427 = vmatprep.subr.mxu0 0.0
  %428 = vmatpush1.msra.mxu0 %v322
  %429 = vmatprep.subr.mxu0 0.0
  %430 = vmatpush1.msra.mxu0 %v321
  %431 = vmatprep.subr.mxu0 0.0
  %432 = vmatpush2.msra.mxu0 0.0
  %433 = vmatprep.subr.mxu0 0.0
  %434 = vmatpush2.msra.mxu0 0.0
  %435 = vmatprep.subr.mxu0 0.0
  %436 = vmatpush2.msra.mxu0 0.0
  %437 = vmatprep.subr.mxu0 0.0
  %438 = vmatpush2.msra.mxu0 0.0
  %439 = vmatprep.subr.mxu0 0.0
  %440 = vmatpush2.msra.mxu0 0.0
  %441 = vmatprep.subr.mxu0 0.0
  %442 = vmatpush2.msra.mxu0 0.0
  %443 = vmatprep.subr.mxu0 0.0
  %444 = vmatpush2.msra.mxu0 0.0
  %445 = vmatprep.subr.mxu0 0.0
  %446 = vmatpush2.msra.mxu0 0.0
  %447 = vmatprep.subr.mxu0 0.0
  %448 = vmatpush2.msra.mxu0 0.0
  %449 = vmatprep.subr.mxu0 0.0
  %450 = vmatpush2.msra.mxu0 0.0
  %451 = vmatprep.subr.mxu0 0.0
  %452 = vmatpush2.msra.mxu0 0.0
  %453 = vmatprep.subr.mxu0 0.0
  %454 = vmatpush2.msra.mxu0 0.0
  %455 = vmatprep.subr.mxu0 0.0
  %456 = vmatpush2.msra.mxu0 0.0
  %457 = vmatprep.subr.mxu0 0.0
  %458 = vmatpush2.msra.mxu0 0.0
  %459 = vmatprep.subr.mxu0 0.0
  %460 = vmatpush2.msra.mxu0 0.0
  %461 = vmatprep.subr.mxu0 0.0
  %462 = vmatpush2.msra.mxu0 0.0
  %463 = vmatprep.mubr.f32.mxu0 0.0
  %464 = vmatmul.mubr.f32.gmra.mxu0 %v397
  %v465 = vpop.f32.mrf.mxu0
  %v466 = vadd.f32 0.0, %v465
  %v467 = vpop.f32.mrf.mxu0
  %468 = vdwg.mxu0
  %v469 = vsub.f32 %v393, %v466
  %470 = vmatprep.subr.mxu0 0.0
  %471 = vmatpush1.msra.mxu0 0.0
  %472 = vmatprep.subr.mxu0 0.0
  %473 = vmatpush1.msra.mxu0 0.0
  %474 = vmatprep.subr.mxu0 0.0
  %475 = vmatpush1.msra.mxu0 0.0
  %476 = vmatprep.subr.mxu0 0.0
  %477 = vmatpush1.msra.mxu0 0.0
  %478 = vmatprep.subr.mxu0 0.0
  %479 = vmatpush1.msra.mxu0 0.0
  %480 = vmatprep.subr.mxu0 0.0
  %481 = vmatpush1.msra.mxu0 0.0
  %482 = vmatprep.subr.mxu0 0.0
  %483 = vmatpush1.msra.mxu0 0.0
  %484 = vmatprep.subr.mxu0 0.0
  %485 = vmatpush1.msra.mxu0 0.0
  %486 = vmatprep.subr.mxu0 0.0
  %487 = vmatpush1.msra.mxu0 0.0
  %488 = vmatprep.subr.mxu0 0.0
  %489 = vmatpush1.msra.mxu0 0.0
  %490 = vmatprep.subr.mxu0 0.0
  %491 = vmatpush1.msra.mxu0 0.0
  %492 = vmatprep.subr.mxu0 0.0
  %493 = vmatpush1.msra.mxu0 0.0
  %494 = vmatprep.subr.mxu0 0.0
  %495 = vmatpush1.msra.mxu0 0.0
  %496 = vmatprep.subr.mxu0 0.0
  %497 = vmatpush1.msra.mxu0 0.0
  %498 = vmatprep.subr.mxu0 0.0
  %499 = vmatpush1.msra.mxu0 %v319
  %500 = vmatprep.subr.mxu0 0.0
  %501 = vmatpush1.msra.mxu0 %v318
  %502 = vmatprep.subr.mxu0 0.0
  %503 = vmatpush2.msra.mxu0 0.0
  %504 = vmatprep.subr.mxu0 0.0
  %505 = vmatpush2.msra.mxu0 0.0
  %506 = vmatprep.subr.mxu0 0.0
  %507 = vmatpush2.msra.mxu0 0.0
  %508 = vmatprep.subr.mxu0 0.0
  %509 = vmatpush2.msra.mxu0 0.0
  %510 = vmatprep.subr.mxu0 0.0
  %511 = vmatpush2.msra.mxu0 0.0
  %512 = vmatprep.subr.mxu0 0.0
  %513 = vmatpush2.msra.mxu0 0.0
  %514 = vmatprep.subr.mxu0 0.0
  %515 = vmatpush2.msra.mxu0 0.0
  %516 = vmatprep.subr.mxu0 0.0
  %517 = vmatpush2.msra.mxu0 0.0
  %518 = vmatprep.subr.mxu0 0.0
  %519 = vmatpush2.msra.mxu0 0.0
  %520 = vmatprep.subr.mxu0 0.0
  %521 = vmatpush2.msra.mxu0 0.0
  %522 = vmatprep.subr.mxu0 0.0
  %523 = vmatpush2.msra.mxu0 0.0
  %524 = vmatprep.subr.mxu0 0.0
  %525 = vmatpush2.msra.mxu0 0.0
  %526 = vmatprep.subr.mxu0 0.0
  %527 = vmatpush2.msra.mxu0 0.0
  %528 = vmatprep.subr.mxu0 0.0
  %529 = vmatpush2.msra.mxu0 0.0
  %530 = vmatprep.subr.mxu0 0.0
  %531 = vmatpush2.msra.mxu0 0.0
  %532 = vmatprep.subr.mxu0 0.0
  %533 = vmatpush2.msra.mxu0 0.0
  %534 = vmatprep.mubr.f32.mxu0 0.0
  %535 = vmatmul.mubr.f32.gmra.mxu0 %v397
  %v536 = vpop.f32.mrf.mxu0
  %v537 = vadd.f32 0.0, %v536
  %v538 = vpop.f32.mrf.mxu0
  %539 = vdwg.mxu0
  %540 = vmatprep.subr.mxu0 0.0
  %541 = vmatpush1.msra.mxu0 0.0
  %542 = vmatprep.subr.mxu0 0.0
  %543 = vmatpush1.msra.mxu0 0.0
  %544 = vmatprep.subr.mxu0 0.0
  %545 = vmatpush1.msra.mxu0 0.0
  %546 = vmatprep.subr.mxu0 0.0
  %547 = vmatpush1.msra.mxu0 0.0
  %548 = vmatprep.subr.mxu0 0.0
  %549 = vmatpush1.msra.mxu0 0.0
  %550 = vmatprep.subr.mxu0 0.0
  %551 = vmatpush1.msra.mxu0 0.0
  %552 = vmatprep.subr.mxu0 0.0
  %553 = vmatpush1.msra.mxu0 0.0
  %554 = vmatprep.subr.mxu0 0.0
  %555 = vmatpush1.msra.mxu0 0.0
  %556 = vmatprep.subr.mxu0 0.0
  %557 = vmatpush1.msra.mxu0 0.0
  %558 = vmatprep.subr.mxu0 0.0
  %559 = vmatpush1.msra.mxu0 0.0
  %560 = vmatprep.subr.mxu0 0.0
  %561 = vmatpush1.msra.mxu0 0.0
  %562 = vmatprep.subr.mxu0 0.0
  %563 = vmatpush1.msra.mxu0 0.0
  %564 = vmatprep.subr.mxu0 0.0
  %565 = vmatpush1.msra.mxu0 0.0
  %566 = vmatprep.subr.mxu0 0.0
  %567 = vmatpush1.msra.mxu0 0.0
  %568 = vmatprep.subr.mxu0 0.0
  %569 = vmatpush1.msra.mxu0 %v322
  %570 = vmatprep.subr.mxu0 0.0
  %571 = vmatpush1.msra.mxu0 %v321
  %572 = vmatprep.subr.mxu0 0.0
  %573 = vmatpush2.msra.mxu0 0.0
  %574 = vmatprep.subr.mxu0 0.0
  %575 = vmatpush2.msra.mxu0 0.0
  %576 = vmatprep.subr.mxu0 0.0
  %577 = vmatpush2.msra.mxu0 0.0
  %578 = vmatprep.subr.mxu0 0.0
  %579 = vmatpush2.msra.mxu0 0.0
  %580 = vmatprep.subr.mxu0 0.0
  %581 = vmatpush2.msra.mxu0 0.0
  %582 = vmatprep.subr.mxu0 0.0
  %583 = vmatpush2.msra.mxu0 0.0
  %584 = vmatprep.subr.mxu0 0.0
  %585 = vmatpush2.msra.mxu0 0.0
  %586 = vmatprep.subr.mxu0 0.0
  %587 = vmatpush2.msra.mxu0 0.0
  %588 = vmatprep.subr.mxu0 0.0
  %589 = vmatpush2.msra.mxu0 0.0
  %590 = vmatprep.subr.mxu0 0.0
  %591 = vmatpush2.msra.mxu0 0.0
  %592 = vmatprep.subr.mxu0 0.0
  %593 = vmatpush2.msra.mxu0 0.0
  %594 = vmatprep.subr.mxu0 0.0
  %595 = vmatpush2.msra.mxu0 0.0
  %596 = vmatprep.subr.mxu0 0.0
  %597 = vmatpush2.msra.mxu0 0.0
  %598 = vmatprep.subr.mxu0 0.0
  %599 = vmatpush2.msra.mxu0 0.0
  %600 = vmatprep.subr.mxu0 0.0
  %601 = vmatpush2.msra.mxu0 0.0
  %602 = vmatprep.subr.mxu0 0.0
  %603 = vmatpush2.msra.mxu0 0.0
  %604 = vmatprep.mubr.f32.mxu0 0.0
  %605 = vmatmul.mubr.f32.gmra.mxu0 %v324
  %v606 = vpop.f32.mrf.mxu0
  %v607 = vadd.f32 %v537, %v606
  %v608 = vpop.f32.mrf.mxu0
  %609 = vdwg.mxu0
  %s610 = scalar_lea.vmem %s2, 32
  %v611 = vld [vmem:[%s610] sm:$0xff]
  %v612 = vld [vmem:[%s610 + $0x8] sm:$0xff]
  %s613 = scalar_lea.vmem %s3, 32
  %v614 = vld [vmem:[%s613] sm:$0xff]
  %v615 = vld [vmem:[%s613 + $0x8] sm:$0xff]
  %v617 = vsel %vm29, %v469, 0
  %619 = vmatprep.subr.mxu0 0.0
  %620 = vmatpush1.msra.mxu0 0.0
  %621 = vmatprep.subr.mxu0 0.0
  %622 = vmatpush1.msra.mxu0 0.0
  %623 = vmatprep.subr.mxu0 0.0
  %624 = vmatpush1.msra.mxu0 0.0
  %625 = vmatprep.subr.mxu0 0.0
  %626 = vmatpush1.msra.mxu0 0.0
  %627 = vmatprep.subr.mxu0 0.0
  %628 = vmatpush1.msra.mxu0 0.0
  %629 = vmatprep.subr.mxu0 0.0
  %630 = vmatpush1.msra.mxu0 0.0
  %631 = vmatprep.subr.mxu0 0.0
  %632 = vmatpush1.msra.mxu0 0.0
  %633 = vmatprep.subr.mxu0 0.0
  %634 = vmatpush1.msra.mxu0 0.0
  %635 = vmatprep.subr.mxu0 0.0
  %636 = vmatpush1.msra.mxu0 0.0
  %637 = vmatprep.subr.mxu0 0.0
  %638 = vmatpush1.msra.mxu0 0.0
  %639 = vmatprep.subr.mxu0 0.0
  %640 = vmatpush1.msra.mxu0 0.0
  %641 = vmatprep.subr.mxu0 0.0
  %642 = vmatpush1.msra.mxu0 0.0
  %643 = vmatprep.subr.mxu0 0.0
  %644 = vmatpush1.msra.mxu0 0.0
  %645 = vmatprep.subr.mxu0 0.0
  %646 = vmatpush1.msra.mxu0 0.0
  %647 = vmatprep.subr.mxu0 0.0
  %648 = vmatpush1.msra.mxu0 %v612
  %649 = vmatprep.subr.mxu0 0.0
  %650 = vmatpush1.msra.mxu0 %v611
  %651 = vmatprep.subr.mxu0 0.0
  %652 = vmatpush2.msra.mxu0 0.0
  %653 = vmatprep.subr.mxu0 0.0
  %654 = vmatpush2.msra.mxu0 0.0
  %655 = vmatprep.subr.mxu0 0.0
  %656 = vmatpush2.msra.mxu0 0.0
  %657 = vmatprep.subr.mxu0 0.0
  %658 = vmatpush2.msra.mxu0 0.0
  %659 = vmatprep.subr.mxu0 0.0
  %660 = vmatpush2.msra.mxu0 0.0
  %661 = vmatprep.subr.mxu0 0.0
  %662 = vmatpush2.msra.mxu0 0.0
  %663 = vmatprep.subr.mxu0 0.0
  %664 = vmatpush2.msra.mxu0 0.0
  %665 = vmatprep.subr.mxu0 0.0
  %666 = vmatpush2.msra.mxu0 0.0
  %667 = vmatprep.subr.mxu0 0.0
  %668 = vmatpush2.msra.mxu0 0.0
  %669 = vmatprep.subr.mxu0 0.0
  %670 = vmatpush2.msra.mxu0 0.0
  %671 = vmatprep.subr.mxu0 0.0
  %672 = vmatpush2.msra.mxu0 0.0
  %673 = vmatprep.subr.mxu0 0.0
  %674 = vmatpush2.msra.mxu0 0.0
  %675 = vmatprep.subr.mxu0 0.0
  %676 = vmatpush2.msra.mxu0 0.0
  %677 = vmatprep.subr.mxu0 0.0
  %678 = vmatpush2.msra.mxu0 0.0
  %679 = vmatprep.subr.mxu0 0.0
  %680 = vmatpush2.msra.mxu0 0.0
  %681 = vmatprep.subr.mxu0 0.0
  %682 = vmatpush2.msra.mxu0 0.0
  %683 = vmatprep.mubr.f32.mxu0 0.0
  %684 = vmatmul.mubr.f32.gmra.mxu0 %v617
  %v685 = vpop.f32.mrf.mxu0
  %v686 = vadd.f32 0.0, %v685
  %v687 = vpop.f32.mrf.mxu0
  %688 = vdwg.mxu0
  %v690 = vsel %vm29, %v607, 0
  %692 = vmatprep.subr.mxu0 0.0
  %693 = vmatpush1.msra.mxu0 0.0
  %694 = vmatprep.subr.mxu0 0.0
  %695 = vmatpush1.msra.mxu0 0.0
  %696 = vmatprep.subr.mxu0 0.0
  %697 = vmatpush1.msra.mxu0 0.0
  %698 = vmatprep.subr.mxu0 0.0
  %699 = vmatpush1.msra.mxu0 0.0
  %700 = vmatprep.subr.mxu0 0.0
  %701 = vmatpush1.msra.mxu0 0.0
  %702 = vmatprep.subr.mxu0 0.0
  %703 = vmatpush1.msra.mxu0 0.0
  %704 = vmatprep.subr.mxu0 0.0
  %705 = vmatpush1.msra.mxu0 0.0
  %706 = vmatprep.subr.mxu0 0.0
  %707 = vmatpush1.msra.mxu0 0.0
  %708 = vmatprep.subr.mxu0 0.0
  %709 = vmatpush1.msra.mxu0 0.0
  %710 = vmatprep.subr.mxu0 0.0
  %711 = vmatpush1.msra.mxu0 0.0
  %712 = vmatprep.subr.mxu0 0.0
  %713 = vmatpush1.msra.mxu0 0.0
  %714 = vmatprep.subr.mxu0 0.0
  %715 = vmatpush1.msra.mxu0 0.0
  %716 = vmatprep.subr.mxu0 0.0
  %717 = vmatpush1.msra.mxu0 0.0
  %718 = vmatprep.subr.mxu0 0.0
  %719 = vmatpush1.msra.mxu0 0.0
  %720 = vmatprep.subr.mxu0 0.0
  %721 = vmatpush1.msra.mxu0 %v615
  %722 = vmatprep.subr.mxu0 0.0
  %723 = vmatpush1.msra.mxu0 %v614
  %724 = vmatprep.subr.mxu0 0.0
  %725 = vmatpush2.msra.mxu0 0.0
  %726 = vmatprep.subr.mxu0 0.0
  %727 = vmatpush2.msra.mxu0 0.0
  %728 = vmatprep.subr.mxu0 0.0
  %729 = vmatpush2.msra.mxu0 0.0
  %730 = vmatprep.subr.mxu0 0.0
  %731 = vmatpush2.msra.mxu0 0.0
  %732 = vmatprep.subr.mxu0 0.0
  %733 = vmatpush2.msra.mxu0 0.0
  %734 = vmatprep.subr.mxu0 0.0
  %735 = vmatpush2.msra.mxu0 0.0
  %736 = vmatprep.subr.mxu0 0.0
  %737 = vmatpush2.msra.mxu0 0.0
  %738 = vmatprep.subr.mxu0 0.0
  %739 = vmatpush2.msra.mxu0 0.0
  %740 = vmatprep.subr.mxu0 0.0
  %741 = vmatpush2.msra.mxu0 0.0
  %742 = vmatprep.subr.mxu0 0.0
  %743 = vmatpush2.msra.mxu0 0.0
  %744 = vmatprep.subr.mxu0 0.0
  %745 = vmatpush2.msra.mxu0 0.0
  %746 = vmatprep.subr.mxu0 0.0
  %747 = vmatpush2.msra.mxu0 0.0
  %748 = vmatprep.subr.mxu0 0.0
  %749 = vmatpush2.msra.mxu0 0.0
  %750 = vmatprep.subr.mxu0 0.0
  %751 = vmatpush2.msra.mxu0 0.0
  %752 = vmatprep.subr.mxu0 0.0
  %753 = vmatpush2.msra.mxu0 0.0
  %754 = vmatprep.subr.mxu0 0.0
  %755 = vmatpush2.msra.mxu0 0.0
  %756 = vmatprep.mubr.f32.mxu0 0.0
  %757 = vmatmul.mubr.f32.gmra.mxu0 %v690
  %v758 = vpop.f32.mrf.mxu0
  %v759 = vadd.f32 0.0, %v758
  %v760 = vpop.f32.mrf.mxu0
  %761 = vdwg.mxu0
  %v762 = vsub.f32 %v686, %v759
  %763 = vmatprep.subr.mxu0 0.0
  %764 = vmatpush1.msra.mxu0 0.0
  %765 = vmatprep.subr.mxu0 0.0
  %766 = vmatpush1.msra.mxu0 0.0
  %767 = vmatprep.subr.mxu0 0.0
  %768 = vmatpush1.msra.mxu0 0.0
  %769 = vmatprep.subr.mxu0 0.0
  %770 = vmatpush1.msra.mxu0 0.0
  %771 = vmatprep.subr.mxu0 0.0
  %772 = vmatpush1.msra.mxu0 0.0
  %773 = vmatprep.subr.mxu0 0.0
  %774 = vmatpush1.msra.mxu0 0.0
  %775 = vmatprep.subr.mxu0 0.0
  %776 = vmatpush1.msra.mxu0 0.0
  %777 = vmatprep.subr.mxu0 0.0
  %778 = vmatpush1.msra.mxu0 0.0
  %779 = vmatprep.subr.mxu0 0.0
  %780 = vmatpush1.msra.mxu0 0.0
  %781 = vmatprep.subr.mxu0 0.0
  %782 = vmatpush1.msra.mxu0 0.0
  %783 = vmatprep.subr.mxu0 0.0
  %784 = vmatpush1.msra.mxu0 0.0
  %785 = vmatprep.subr.mxu0 0.0
  %786 = vmatpush1.msra.mxu0 0.0
  %787 = vmatprep.subr.mxu0 0.0
  %788 = vmatpush1.msra.mxu0 0.0
  %789 = vmatprep.subr.mxu0 0.0
  %790 = vmatpush1.msra.mxu0 0.0
  %791 = vmatprep.subr.mxu0 0.0
  %792 = vmatpush1.msra.mxu0 %v612
  %793 = vmatprep.subr.mxu0 0.0
  %794 = vmatpush1.msra.mxu0 %v611
  %795 = vmatprep.subr.mxu0 0.0
  %796 = vmatpush2.msra.mxu0 0.0
  %797 = vmatprep.subr.mxu0 0.0
  %798 = vmatpush2.msra.mxu0 0.0
  %799 = vmatprep.subr.mxu0 0.0
  %800 = vmatpush2.msra.mxu0 0.0
  %801 = vmatprep.subr.mxu0 0.0
  %802 = vmatpush2.msra.mxu0 0.0
  %803 = vmatprep.subr.mxu0 0.0
  %804 = vmatpush2.msra.mxu0 0.0
  %805 = vmatprep.subr.mxu0 0.0
  %806 = vmatpush2.msra.mxu0 0.0
  %807 = vmatprep.subr.mxu0 0.0
  %808 = vmatpush2.msra.mxu0 0.0
  %809 = vmatprep.subr.mxu0 0.0
  %810 = vmatpush2.msra.mxu0 0.0
  %811 = vmatprep.subr.mxu0 0.0
  %812 = vmatpush2.msra.mxu0 0.0
  %813 = vmatprep.subr.mxu0 0.0
  %814 = vmatpush2.msra.mxu0 0.0
  %815 = vmatprep.subr.mxu0 0.0
  %816 = vmatpush2.msra.mxu0 0.0
  %817 = vmatprep.subr.mxu0 0.0
  %818 = vmatpush2.msra.mxu0 0.0
  %819 = vmatprep.subr.mxu0 0.0
  %820 = vmatpush2.msra.mxu0 0.0
  %821 = vmatprep.subr.mxu0 0.0
  %822 = vmatpush2.msra.mxu0 0.0
  %823 = vmatprep.subr.mxu0 0.0
  %824 = vmatpush2.msra.mxu0 0.0
  %825 = vmatprep.subr.mxu0 0.0
  %826 = vmatpush2.msra.mxu0 0.0
  %827 = vmatprep.mubr.f32.mxu0 0.0
  %828 = vmatmul.mubr.f32.gmra.mxu0 %v690
  %v829 = vpop.f32.mrf.mxu0
  %v830 = vadd.f32 0.0, %v829
  %v831 = vpop.f32.mrf.mxu0
  %832 = vdwg.mxu0
  %833 = vmatprep.subr.mxu0 0.0
  %834 = vmatpush1.msra.mxu0 0.0
  %835 = vmatprep.subr.mxu0 0.0
  %836 = vmatpush1.msra.mxu0 0.0
  %837 = vmatprep.subr.mxu0 0.0
  %838 = vmatpush1.msra.mxu0 0.0
  %839 = vmatprep.subr.mxu0 0.0
  %840 = vmatpush1.msra.mxu0 0.0
  %841 = vmatprep.subr.mxu0 0.0
  %842 = vmatpush1.msra.mxu0 0.0
  %843 = vmatprep.subr.mxu0 0.0
  %844 = vmatpush1.msra.mxu0 0.0
  %845 = vmatprep.subr.mxu0 0.0
  %846 = vmatpush1.msra.mxu0 0.0
  %847 = vmatprep.subr.mxu0 0.0
  %848 = vmatpush1.msra.mxu0 0.0
  %849 = vmatprep.subr.mxu0 0.0
  %850 = vmatpush1.msra.mxu0 0.0
  %851 = vmatprep.subr.mxu0 0.0
  %852 = vmatpush1.msra.mxu0 0.0
  %853 = vmatprep.subr.mxu0 0.0
  %854 = vmatpush1.msra.mxu0 0.0
  %855 = vmatprep.subr.mxu0 0.0
  %856 = vmatpush1.msra.mxu0 0.0
  %857 = vmatprep.subr.mxu0 0.0
  %858 = vmatpush1.msra.mxu0 0.0
  %859 = vmatprep.subr.mxu0 0.0
  %860 = vmatpush1.msra.mxu0 0.0
  %861 = vmatprep.subr.mxu0 0.0
  %862 = vmatpush1.msra.mxu0 %v615
  %863 = vmatprep.subr.mxu0 0.0
  %864 = vmatpush1.msra.mxu0 %v614
  %865 = vmatprep.subr.mxu0 0.0
  %866 = vmatpush2.msra.mxu0 0.0
  %867 = vmatprep.subr.mxu0 0.0
  %868 = vmatpush2.msra.mxu0 0.0
  %869 = vmatprep.subr.mxu0 0.0
  %870 = vmatpush2.msra.mxu0 0.0
  %871 = vmatprep.subr.mxu0 0.0
  %872 = vmatpush2.msra.mxu0 0.0
  %873 = vmatprep.subr.mxu0 0.0
  %874 = vmatpush2.msra.mxu0 0.0
  %875 = vmatprep.subr.mxu0 0.0
  %876 = vmatpush2.msra.mxu0 0.0
  %877 = vmatprep.subr.mxu0 0.0
  %878 = vmatpush2.msra.mxu0 0.0
  %879 = vmatprep.subr.mxu0 0.0
  %880 = vmatpush2.msra.mxu0 0.0
  %881 = vmatprep.subr.mxu0 0.0
  %882 = vmatpush2.msra.mxu0 0.0
  %883 = vmatprep.subr.mxu0 0.0
  %884 = vmatpush2.msra.mxu0 0.0
  %885 = vmatprep.subr.mxu0 0.0
  %886 = vmatpush2.msra.mxu0 0.0
  %887 = vmatprep.subr.mxu0 0.0
  %888 = vmatpush2.msra.mxu0 0.0
  %889 = vmatprep.subr.mxu0 0.0
  %890 = vmatpush2.msra.mxu0 0.0
  %891 = vmatprep.subr.mxu0 0.0
  %892 = vmatpush2.msra.mxu0 0.0
  %893 = vmatprep.subr.mxu0 0.0
  %894 = vmatpush2.msra.mxu0 0.0
  %895 = vmatprep.subr.mxu0 0.0
  %896 = vmatpush2.msra.mxu0 0.0
  %897 = vmatprep.mubr.f32.mxu0 0.0
  %898 = vmatmul.mubr.f32.gmra.mxu0 %v617
  %v899 = vpop.f32.mrf.mxu0
  %v900 = vadd.f32 %v830, %v899
  %v901 = vpop.f32.mrf.mxu0
  %902 = vdwg.mxu0
  %v903 = vmul.f32 %v762, %v762
  %v904 = vmul.f32 %v900, %v900
  %v905 = vadd.f32 %v903, %v904
  %v906 = vld [vmem:[%s4] sm:$0xff]
  %v907 = vld [vmem:[%s4 + $0x8] sm:$0xff]
  %v908 = vld [vmem:[%s5] sm:$0x1]
  %v910 = vlaneseq
  %v911 = vshrl.u32 %v910, 7
  %v912 = vsub.s32 0, %v911
  %v913 = vrot.slane %v908, %v912
  %v916 = vsel %vm29, %v905, 0
  %918 = vmatprep.subr.mxu0 0.0
  %919 = vmatpush1.msra.mxu0 0.0
  %920 = vmatprep.subr.mxu0 0.0
  %921 = vmatpush1.msra.mxu0 0.0
  %922 = vmatprep.subr.mxu0 0.0
  %923 = vmatpush1.msra.mxu0 0.0
  %924 = vmatprep.subr.mxu0 0.0
  %925 = vmatpush1.msra.mxu0 0.0
  %926 = vmatprep.subr.mxu0 0.0
  %927 = vmatpush1.msra.mxu0 0.0
  %928 = vmatprep.subr.mxu0 0.0
  %929 = vmatpush1.msra.mxu0 0.0
  %930 = vmatprep.subr.mxu0 0.0
  %931 = vmatpush1.msra.mxu0 0.0
  %932 = vmatprep.subr.mxu0 0.0
  %933 = vmatpush1.msra.mxu0 0.0
  %934 = vmatprep.subr.mxu0 0.0
  %935 = vmatpush1.msra.mxu0 0.0
  %936 = vmatprep.subr.mxu0 0.0
  %937 = vmatpush1.msra.mxu0 0.0
  %938 = vmatprep.subr.mxu0 0.0
  %939 = vmatpush1.msra.mxu0 0.0
  %940 = vmatprep.subr.mxu0 0.0
  %941 = vmatpush1.msra.mxu0 0.0
  %942 = vmatprep.subr.mxu0 0.0
  %943 = vmatpush1.msra.mxu0 0.0
  %944 = vmatprep.subr.mxu0 0.0
  %945 = vmatpush1.msra.mxu0 0.0
  %946 = vmatprep.subr.mxu0 0.0
  %947 = vmatpush1.msra.mxu0 %v907
  %948 = vmatprep.subr.mxu0 0.0
  %949 = vmatpush1.msra.mxu0 %v906
  %950 = vmatprep.subr.mxu0 0.0
  %951 = vmatpush2.msra.mxu0 0.0
  %952 = vmatprep.subr.mxu0 0.0
  %953 = vmatpush2.msra.mxu0 0.0
  %954 = vmatprep.subr.mxu0 0.0
  %955 = vmatpush2.msra.mxu0 0.0
  %956 = vmatprep.subr.mxu0 0.0
  %957 = vmatpush2.msra.mxu0 0.0
  %958 = vmatprep.subr.mxu0 0.0
  %959 = vmatpush2.msra.mxu0 0.0
  %960 = vmatprep.subr.mxu0 0.0
  %961 = vmatpush2.msra.mxu0 0.0
  %962 = vmatprep.subr.mxu0 0.0
  %963 = vmatpush2.msra.mxu0 0.0
  %964 = vmatprep.subr.mxu0 0.0
  %965 = vmatpush2.msra.mxu0 0.0
  %966 = vmatprep.subr.mxu0 0.0
  %967 = vmatpush2.msra.mxu0 0.0
  %968 = vmatprep.subr.mxu0 0.0
  %969 = vmatpush2.msra.mxu0 0.0
  %970 = vmatprep.subr.mxu0 0.0
  %971 = vmatpush2.msra.mxu0 0.0
  %972 = vmatprep.subr.mxu0 0.0
  %973 = vmatpush2.msra.mxu0 0.0
  %974 = vmatprep.subr.mxu0 0.0
  %975 = vmatpush2.msra.mxu0 0.0
  %976 = vmatprep.subr.mxu0 0.0
  %977 = vmatpush2.msra.mxu0 0.0
  %978 = vmatprep.subr.mxu0 0.0
  %979 = vmatpush2.msra.mxu0 0.0
  %980 = vmatprep.subr.mxu0 0.0
  %981 = vmatpush2.msra.mxu0 0.0
  %982 = vmatprep.mubr.f32.mxu0 0.0
  %983 = vmatmul.mubr.f32.gmra.mxu0 %v916
  %v984 = vpop.f32.mrf.mxu0
  %v985 = vadd.f32 %v913, %v984
  %v986 = vpop.f32.mrf.mxu0
  %987 = vdwg.mxu0
  %988 = vst [vmem:[%s6] sm:$0xff] %v985
  // Predicated region
  $region26: #{quantum_generator_forward.1} parent=0 // pred_check
    _
  $region27: #{quantum_generator_forward.1} parent=0 // pred_check_branch
    %990 = sbr.rel (0) target = $region29
  $region28: #{quantum_generator_forward.1} parent=0 // pred_region
    _
  $region29: #{quantum_generator_forward.1} parent=0 // pred_fallthru
    _
  // Predicated region
  $region30: #{quantum_generator_forward.1} parent=0 // pred_check
    _
  $region31: #{quantum_generator_forward.1} parent=0 // pred_check_branch
    %992 = sbr.rel (0) target = $region33
  $region32: #{quantum_generator_forward.1} parent=0 // pred_region
    _
  $region33: #{quantum_generator_forward.1} parent=0 // pred_fallthru
    _

</llo_original>
